<compile_context>
chip_gen: v6e
topology: v6e:2x2x1
jax: 0.10.0
libtpu: 0.0.40
codegen_flags: <defaults>
</compile_context>

<pallas_src>
import jax
import jax.numpy as jnp
from jax import lax
from jax.experimental import pallas as pl
from jax.experimental.pallas import tpu as pltpu


def attention_kernel(enc_ref, dproj_ref, madd_ref, we_ref, vw_ref, vb_ref, out_ref):
    # enc_ref   : (BB, Sp, Hp)   cdt  encoder outputs (hidden zero-padded)
    # dproj_ref : (BB, 1, Hp)    f32  W_decoder(h) + b_dec + b_enc (hoisted)
    # madd_ref  : (1, 1, BB*Sp)  f32  additive mask (-inf where masked, 0 else)
    # we_ref    : (Hp, Hp)       cdt  W_encoder, pre-transposed to (in, out)
    # vw_ref    : (1, Hp)        cdt  V weight
    # vb_ref    : (1,) f32 SMEM       V bias (scalar)
    # out_ref   : (1, 1, BB*Sp)  f32  lane-dense scores
    bb, s, hp = enc_ref.shape

    # W_encoder(encoder_outputs): one big (BB*Sp, Hp) @ (Hp, Hp) MXU pass.
    enc2d = enc_ref[...].reshape(bb * s, hp)
    e = jnp.dot(enc2d, we_ref[...], preferred_element_type=jnp.float32)  # (BB*Sp, Hp)

    # Add the per-batch-element decoder projection (bias already folded in),
    # then tanh in the compute dtype (bf16 EUP path on v6e/v7x, f32 on v5e).
    t = jnp.tanh((e.reshape(bb, s, hp) + dproj_ref[...]).astype(enc_ref.dtype))

    # V(...): contract the hidden dim on the MXU; result is lane-dense (1, BB*Sp).
    scores = lax.dot_general(
        vw_ref[...], t.reshape(bb * s, hp),
        dimension_numbers=(((1,), (1,)), ((), ())),
        preferred_element_type=jnp.float32,
    ) + vb_ref[0]                                                 # (1, BB*Sp)

    # masked_fill_(mask, -inf) as a single lane-dense add.
    out_ref[0] = scores + madd_ref[0]


def _device_config(compute_dtype=None):
    """Per-generation compute dtype, VMEM limit, block byte budget, core count."""
    try:
        kind = jax.devices()[0].device_kind.lower()
    except Exception:  # pragma: no cover - defensive
        kind = ""
    is_v5e = ("v5 lite" in kind) or ("v5e" in kind) or ("v5litepod" in kind)
    is_v7 = "v7" in kind
    two_cores = is_v7 or ("v4" in kind) or ("v5p" in kind)
    if compute_dtype is None:
        # bf16 MXU/EUP path on v6e/v7x (and other bf16-capable parts);
        # keep f32 on v5e (no bf16 VPU/EUP path).
        compute_dtype = jnp.float32 if is_v5e else jnp.bfloat16
    if is_v7:
        vmem_limit, target_block = 40 << 20, 2 << 20   # 64 MiB physical VMEM
    elif is_v5e:
        vmem_limit, target_block = 64 << 20, 2 << 20   # raise 16 MiB scoped default
    else:
        vmem_limit, target_block = 64 << 20, 4 << 20   # v6e-class, 128 MiB physical
    return compute_dtype, vmem_limit, target_block, (2 if two_cores else 1)


def _pick_block_b(B, Sp, Hp, itemsize, target_block_bytes, num_cores):
    """Batch elements per grid step: biggest block within the byte budget,
    while keeping at least `num_cores` grid steps for megacore sharding."""
    row_bytes = Sp * Hp * itemsize
    bb = max(1, int(target_block_bytes // max(row_bytes, 1)))
    bb = min(bb, B)
    if num_cores > 1 and B > 1:
        bb = min(bb, pl.cdiv(B, num_cores))
    return max(bb, 1)


def pointer_attention(encoder_outputs, decoder_hidden, mask, params,
                      *, block_b=None, compute_dtype=None):
    """encoder_outputs (B,S,H) f32, decoder_hidden (B,H) f32, mask (B,S) bool
    -> scores (B,S) f32 with masked positions set to -inf."""
    B, S, H = encoder_outputs.shape
    cdt, vmem_limit, target_block, ncores = _device_config(compute_dtype)
    itemsize = jnp.dtype(cdt).itemsize

    Hp = pl.cdiv(H, 128) * 128                   # lane-dense hidden dim
    sub = 16 if itemsize == 2 else 8             # sublane packing of cdt
    Sp = pl.cdiv(S, sub) * sub                   # sublane-aligned seq dim

    mask = mask.astype(bool)
    we_t = params["W_encoder_w"].T.astype(jnp.float32)       # (H, H) as (in, out)
    vw = params["V_w"].reshape(1, H).astype(jnp.float32)     # (1, H)
    vb = params["V_b"].reshape(1).astype(jnp.float32)        # (1,)

    # Hoist the decoder projection and fold the encoder bias into it:
    # (enc @ We^T + b_e) + (dec @ Wd^T + b_d) == enc @ We^T + dproj.
    dproj = (decoder_hidden @ params["W_decoder_w"].T
             + params["W_decoder_b"] + params["W_encoder_b"])  # (B, H)

    # Zero-pad the hidden dim to a multiple of 128.  Padded columns produce
    # tanh(0)=0 and get weight 0 in V, so scores are unchanged.
    if Hp != H:
        ph = Hp - H
        encoder_outputs = jnp.pad(encoder_outputs, ((0, 0), (0, 0), (0, ph)))
        we_t = jnp.pad(we_t, ((0, ph), (0, ph)))
        vw = jnp.pad(vw, ((0, 0), (0, ph)))
        dproj = jnp.pad(dproj, ((0, 0), (0, ph)))
    # Pad seq so in-kernel reshapes stay tile-aligned; padded steps are masked
    # (and sliced off at the end).
    if Sp != S:
        encoder_outputs = jnp.pad(encoder_outputs, ((0, 0), (0, Sp - S), (0, 0)))
        mask = jnp.pad(mask, ((0, 0), (0, Sp - S)), constant_values=True)

    if block_b is None:
        block_b = _pick_block_b(B, Sp, Hp, itemsize, target_block, ncores)
    block_b = max(1, min(int(block_b), B))

    # Pad batch up to a multiple of block_b (instead of shrinking block_b for
    # awkward / prime B).  Pad rows are fully masked and sliced off.
    Bp = pl.cdiv(B, block_b) * block_b
    if Bp != B:
        pb = Bp - B
        encoder_outputs = jnp.pad(encoder_outputs, ((0, pb), (0, 0), (0, 0)))
        dproj = jnp.pad(dproj, ((0, pb), (0, 0)))
        mask = jnp.pad(mask, ((0, pb), (0, 0)), constant_values=True)

    nb = Bp // block_b
    bs = block_b * Sp

    enc_c = encoder_outputs.astype(cdt)
    we_c = we_t.astype(cdt)
    vw_c = vw.astype(cdt)
    dproj = dproj.astype(jnp.float32).reshape(Bp, 1, Hp)
    # Additive mask (-inf where masked, 0 elsewhere), lane-dense layout.
    mask_add = jnp.where(mask, -jnp.inf, 0.0).astype(jnp.float32).reshape(nb, 1, bs)

    cost = pl.CostEstimate(
        flops=2 * Bp * Sp * Hp * (Hp + 1),
        transcendentals=Bp * Sp * Hp,
        bytes_accessed=(enc_c.size * itemsize + we_c.size * itemsize
                        + vw_c.size * itemsize + dproj.size * 4
                        + mask_add.size * 4 + nb * bs * 4),
    )

    out = pl.pallas_call(
        attention_kernel,
        out_shape=jax.ShapeDtypeStruct((nb, 1, bs), jnp.float32),
        grid_spec=pltpu.PrefetchScalarGridSpec(
            num_scalar_prefetch=0,
            grid=(nb,),
            in_specs=[
                pl.BlockSpec((block_b, Sp, Hp), lambda b: (b, 0, 0)),   # encoder block
                pl.BlockSpec((block_b, 1, Hp), lambda b: (b, 0, 0)),    # decoder proj (+biases)
                pl.BlockSpec((1, 1, bs), lambda b: (b, 0, 0)),          # additive mask
                pl.BlockSpec((Hp, Hp), lambda b: (0, 0)),               # W_encoder (in,out)
                pl.BlockSpec((1, Hp), lambda b: (0, 0)),                # V weight
                pl.BlockSpec(memory_space=pltpu.MemorySpace.SMEM),      # V bias (scalar)
            ],
            out_specs=pl.BlockSpec((1, 1, bs), lambda b: (b, 0, 0)),
        ),
        compiler_params=pltpu.CompilerParams(
            dimension_semantics=("parallel",),
            vmem_limit_bytes=vmem_limit),
        cost_estimate=cost,
    )(enc_c, dproj, mask_add, we_c, vw_c, vb)

    return out.reshape(Bp, Sp)[:B, :S]


def init_params(key, hidden_dim):
    ks = jax.random.split(key, 6)
    scale = 1.0 / jnp.sqrt(hidden_dim)
    return {
        "W_encoder_w": jax.random.uniform(ks[0], (hidden_dim, hidden_dim),
                                          jnp.float32, -scale, scale),
        "W_encoder_b": jax.random.uniform(ks[1], (hidden_dim,), jnp.float32, -scale, scale),
        "W_decoder_w": jax.random.uniform(ks[2], (hidden_dim, hidden_dim),
                                          jnp.float32, -scale, scale),
        "W_decoder_b": jax.random.uniform(ks[3], (hidden_dim,), jnp.float32, -scale, scale),
        "V_w": jax.random.uniform(ks[4], (1, hidden_dim), jnp.float32, -scale, scale),
        "V_b": jax.random.uniform(ks[5], (1,), jnp.float32, -scale, scale),
    }


def reference_attention(encoder_outputs, decoder_hidden, mask, p):
    e = encoder_outputs @ p["W_encoder_w"].T + p["W_encoder_b"]
    d = (decoder_hidden @ p["W_decoder_w"].T + p["W_decoder_b"])[:, None, :]
    s = (jnp.tanh(e + d) @ p["V_w"].T + p["V_b"])[..., 0]
    # Note: fully-masked rows are all -inf (NaN in a downstream softmax),
    # identical to the PyTorch module's behavior.
    return jnp.where(mask, -jnp.inf, s)


if __name__ == "__main__":
    B, S, H = 2, 8, 32
    key = jax.random.PRNGKey(0)
    k_enc, k_dec, k_mask, k_params = jax.random.split(key, 4)

    encoder_outputs = jax.random.normal(k_enc, (B, S, H), jnp.float32)
    decoder_hidden = jax.random.normal(k_dec, (B, H), jnp.float32)
    mask = jax.random.bernoulli(k_mask, 0.3, (B, S))
    params = init_params(k_params, H)

    scores = pointer_attention(encoder_outputs, decoder_hidden, mask, params)
    scores = jax.block_until_ready(scores)

    ref = reference_attention(encoder_outputs, decoder_hidden, mask, params)
    assert scores.shape == (B, S)

    cdt, *_ = _device_config(None)
    # bf16 MXU/tanh path (v6e/v7x) needs a looser tolerance; f32 keeps 1e-4.
    tol = 1e-4 if cdt == jnp.float32 else 5e-2
    ok = (jnp.isclose(scores, ref, atol=tol, rtol=tol)
          | (jnp.isinf(scores) & jnp.isinf(ref) & (jnp.sign(scores) == jnp.sign(ref))))
    assert bool(jnp.all(ok))
    print("KERNEL_OK")
</pallas_src>

<mosaic_0001>
module attributes {stable_mosaic.version = 11 : i64} {
  func.func @attention_kernel(%arg0: i32, %arg1: memref<2x16x128xbf16, #tpu.memory_space<vmem>>, %arg2: memref<2x1x128xf32, #tpu.memory_space<vmem>>, %arg3: memref<1x1x32xf32, #tpu.memory_space<vmem>>, %arg4: memref<128x128xbf16, #tpu.memory_space<vmem>>, %arg5: memref<1x128xbf16, #tpu.memory_space<vmem>>, %arg6: memref<1xf32, #tpu.memory_space<smem>>, %arg7: memref<1x1x32xf32, #tpu.memory_space<vmem>>) attributes {dimension_semantics = [#tpu.dimension_semantics<parallel>], iteration_bounds = array<i64: 1>, scalar_prefetch = 0 : i64, scratch_operands = 0 : i64, tpu.core_type = #tpu.core_type<tc>, window_params = [{transform_indices = @transform_0, window_bounds = array<i64: 2, 16, 128>}, {transform_indices = @transform_1, window_bounds = array<i64: 2, 1, 128>}, {transform_indices = @transform_2, window_bounds = array<i64: 1, 1, 32>}, {pipeline_mode = #tpu.pipeline_mode<synchronous>, transform_indices = @transform_3, window_bounds = array<i64: 128, 128>}, {pipeline_mode = #tpu.pipeline_mode<synchronous>, transform_indices = @transform_4, window_bounds = array<i64: 1, 128>}, {transform_indices = @transform_5, window_bounds = array<i64: 1>}, {transform_indices = @transform_6, window_bounds = array<i64: 1, 1, 32>}]} {
    %c0 = arith.constant 0 : index
    %c0_0 = arith.constant 0 : index
    %c0_1 = arith.constant 0 : index
    %0 = vector.load %arg1[%c0, %c0_0, %c0_1] : memref<2x16x128xbf16, #tpu.memory_space<vmem>>, vector<2x16x128xbf16>
    %1 = vector.shape_cast %0 : vector<2x16x128xbf16> to vector<32x128xbf16>
    %c0_2 = arith.constant 0 : index
    %c0_3 = arith.constant 0 : index
    %2 = vector.load %arg4[%c0_2, %c0_3] : memref<128x128xbf16, #tpu.memory_space<vmem>>, vector<128x128xbf16>
    %cst = arith.constant dense<0.000000e+00> : vector<32x128xf32>
    %3 = tpu.matmul %1, %2, %cst {dimension_numbers = #tpu.dot_dimension_numbers<[1], [0], [0], [1], [0, 0, 1, 1], [], []>} : vector<32x128xbf16>, vector<128x128xbf16>, vector<32x128xf32> -> vector<32x128xf32>
    %4 = vector.shape_cast %3 : vector<32x128xf32> to vector<2x16x128xf32>
    %c0_4 = arith.constant 0 : index
    %c0_5 = arith.constant 0 : index
    %c0_6 = arith.constant 0 : index
    %5 = vector.load %arg2[%c0_4, %c0_5, %c0_6] : memref<2x1x128xf32, #tpu.memory_space<vmem>>, vector<2x1x128xf32>
    %6 = vector.broadcast %5 : vector<2x1x128xf32> to vector<2x16x128xf32>
    %7 = arith.addf %4, %6 : vector<2x16x128xf32>
    %8 = arith.truncf %7 : vector<2x16x128xf32> to vector<2x16x128xbf16>
    %9 = math.tanh %8 : vector<2x16x128xbf16>
    %c0_7 = arith.constant 0 : index
    %c0_8 = arith.constant 0 : index
    %10 = vector.load %arg5[%c0_7, %c0_8] : memref<1x128xbf16, #tpu.memory_space<vmem>>, vector<1x128xbf16>
    %11 = vector.shape_cast %9 : vector<2x16x128xbf16> to vector<32x128xbf16>
    %cst_9 = arith.constant dense<0.000000e+00> : vector<1x32xf32>
    %12 = tpu.matmul %10, %11, %cst_9 {dimension_numbers = #tpu.dot_dimension_numbers<[1], [1], [0], [0], [0, 0, 1, 0], [], []>} : vector<1x128xbf16>, vector<32x128xbf16>, vector<1x32xf32> -> vector<1x32xf32>
    %c0_10 = arith.constant 0 : index
    %13 = memref.load %arg6[%c0_10] : memref<1xf32, #tpu.memory_space<smem>>
    %14 = vector.broadcast %13 : f32 to vector<1x32xf32>
    %15 = arith.addf %12, %14 : vector<1x32xf32>
    %c0_11 = arith.constant 0 : index
    %c0_12 = arith.constant 0 : index
    %c0_13 = arith.constant 0 : index
    %16 = vector.load %arg3[%c0_11, %c0_12, %c0_13] : memref<1x1x32xf32, #tpu.memory_space<vmem>>, vector<1x1x32xf32>
    %17 = vector.shape_cast %16 : vector<1x1x32xf32> to vector<1x32xf32>
    %18 = arith.addf %15, %17 : vector<1x32xf32>
    %c0_14 = arith.constant 0 : index
    %c0_15 = arith.constant 0 : index
    %c0_16 = arith.constant 0 : index
    %19 = vector.load %arg7[%c0_14, %c0_15, %c0_16] : memref<1x1x32xf32, #tpu.memory_space<vmem>>, vector<1x1x32xf32>
    %20 = vector.shape_cast %19 : vector<1x1x32xf32> to vector<1x32xf32>
    %21 = vector.shape_cast %18 : vector<1x32xf32> to vector<1x1x32xf32>
    tpu.vector_store %arg7[%c0_14, %c0_15, %c0_16], %21 {strides = array<i32>} : memref<1x1x32xf32, #tpu.memory_space<vmem>>, vector<1x1x32xf32>,
    return
  }
  func.func @transform_0(%arg0: i32) -> (i32, i32, i32) {
    %c0_i32 = arith.constant 0 : i32
    %c0_i32_0 = arith.constant 0 : i32
    %c0_i32_1 = arith.constant 0 : i32
    return %arg0, %c0_i32, %c0_i32_0 : i32, i32, i32
  }
  func.func @transform_1(%arg0: i32) -> (i32, i32, i32) {
    %c0_i32 = arith.constant 0 : i32
    %c0_i32_0 = arith.constant 0 : i32
    %c0_i32_1 = arith.constant 0 : i32
    return %arg0, %c0_i32, %c0_i32_0 : i32, i32, i32
  }
  func.func @transform_2(%arg0: i32) -> (i32, i32, i32) {
    %c0_i32 = arith.constant 0 : i32
    %c0_i32_0 = arith.constant 0 : i32
    %c0_i32_1 = arith.constant 0 : i32
    return %arg0, %c0_i32, %c0_i32_0 : i32, i32, i32
  }
  func.func @transform_3(%arg0: i32) -> (i32, i32) {
    %c0_i32 = arith.constant 0 : i32
    %c0_i32_0 = arith.constant 0 : i32
    %c0_i32_1 = arith.constant 0 : i32
    return %c0_i32, %c0_i32_0 : i32, i32
  }
  func.func @transform_4(%arg0: i32) -> (i32, i32) {
    %c0_i32 = arith.constant 0 : i32
    %c0_i32_0 = arith.constant 0 : i32
    %c0_i32_1 = arith.constant 0 : i32
    return %c0_i32, %c0_i32_0 : i32, i32
  }
  func.func @transform_5(%arg0: i32) -> i32 {
    %c0_i32 = arith.constant 0 : i32
    %c0_i32_0 = arith.constant 0 : i32
    return %c0_i32 : i32
  }
  func.func @transform_6(%arg0: i32) -> (i32, i32, i32) {
    %c0_i32 = arith.constant 0 : i32
    %c0_i32_0 = arith.constant 0 : i32
    %c0_i32_1 = arith.constant 0 : i32
    return %arg0, %c0_i32, %c0_i32_0 : i32, i32, i32
  }
}

</mosaic_0001>

<llo_original>
// kernel: tpu_custom_call.1
$region0: #{tpu_custom_call.1}
  #allocation0 [shape = 'u32[]', space=smem, size = 0x4, offset = 0x4, fixed_abs, tag = 'smem constant byte address 0x4 - core index']
  #allocation1 [shape = 'u32[144,128]{1,0:T(1,128)}', space=vmem, size = 0x12000, scoped, tag = 'internal scratch']
  #allocation2 [shape = 'f32[1]{0:T(128)S(6)}', space=smem, size = 0x200, scoped, tag = 'scoped memory for tpu_custom_call.1']
  %s0 = inlined_call_operand.hbm [shape: bf16[2,16,128], index: 0, kind: input, shape index: {}]
  %s1 = inlined_call_operand.vmem [shape: f32[2,1,128], index: 1, kind: input, shape index: {}]
  %s2 = inlined_call_operand.vmem [shape: f32[1,1,32], index: 2, kind: input, shape index: {}]
  %s3 = inlined_call_operand.hbm [shape: bf16[128,128], index: 3, kind: input, shape index: {}]
  %s4 = inlined_call_operand.vmem [shape: bf16[1,128], index: 4, kind: input, shape index: {}]
  %s5 = inlined_call_operand.<no memory space> [shape: f32[1], index: 5, kind: input, shape index: {}]
  %s6 = inlined_call_operand.hbm [shape: f32[1,1,32], index: 6, kind: output, shape index: {}]
  %s7 = sld [smem:[#allocation0]]
  $region42: #{tpu_custom_call.1} parent=0
    _
  %s9 = ssub.s32 1, %s7
  %s10 = scalar_select 0, %s9, %s7
  %11 = sst [smem:[#allocation2]] %s5
  $region1: #{tpu_custom_call.1} parent=0
    #allocation3 [shape = 'u8[8192]{0}', space=vmem, size = 0x2000, scoped, tag = 'input window, operand 0, single buffered']
    #allocation4 [shape = 's32[1]{0}', space=sflag, size = 0x4, scoped, tag = 'scoped memory for tpu_custom_call.1']
    #allocation5 [shape = 's32[1]{0}', space=sflag, size = 0x4, scoped, tag = 'scoped memory for tpu_custom_call.1']
    #allocation6 [shape = 'u8[32768]{0}', space=vmem, size = 0x8000, scoped, tag = 'input window, operand 3, single buffered']
    #allocation7 [shape = 's32[1]{0}', space=sflag, size = 0x4, scoped, tag = 'scoped memory for tpu_custom_call.1']
    #allocation8 [shape = 'u8[512]{0}', space=vmem, size = 0x400, scoped, tag = 'output window, operand 0, single buffered']
    %12 = vsyncpa [#allocation4], 0
    %13 = vsyncpa [#allocation7], 0
    %14 = vsyncpa [#allocation5], 0
    // Predicated region
    $region2: #{tpu_custom_call.1} parent=1 // pred_check
      _
    $region3: #{tpu_custom_call.1} parent=1 // pred_check_branch
      %16 = sbr.rel (0) target = $region5
    $region4: #{tpu_custom_call.1} parent=1 // pred_region
      %s18 = ssub.s32 256, 256
      %19 = vsyncadd [#allocation4], %s18
      %s20 = sshll.u32 [#allocation3], 4
      %s21 = int_to_ptr.vmem [resolvable:$true] %s20
      %26 = dma.hbm_to_vmem [thread:$0]  %s0, 256, %s21, [#allocation4], 64, 64, 4
    $region5: #{tpu_custom_call.1} parent=1 // pred_fallthru
      _
    // Predicated region
    $region6: #{tpu_custom_call.1} parent=1 // pred_check
      _
    $region7: #{tpu_custom_call.1} parent=1 // pred_check_branch
      %28 = sbr.rel (0) target = $region9
    $region8: #{tpu_custom_call.1} parent=1 // pred_region
      _
    $region9: #{tpu_custom_call.1} parent=1 // pred_fallthru
      _
    // Predicated region
    $region10: #{tpu_custom_call.1} parent=1 // pred_check
      _
    $region11: #{tpu_custom_call.1} parent=1 // pred_check_branch
      %30 = sbr.rel (0) target = $region13
    $region12: #{tpu_custom_call.1} parent=1 // pred_region
      _
    $region13: #{tpu_custom_call.1} parent=1 // pred_fallthru
      _
    // Predicated region
    $region14: #{tpu_custom_call.1} parent=1 // pred_check
      _
    $region15: #{tpu_custom_call.1} parent=1 // pred_check_branch
      %32 = sbr.rel (0) target = $region17
    $region16: #{tpu_custom_call.1} parent=1 // pred_region
      %s34 = ssub.s32 1024, 1024
      %35 = vsyncadd [#allocation7], %s34
      %s36 = sshll.u32 [#allocation6], 4
      %s37 = int_to_ptr.vmem [resolvable:$true] %s36
      %42 = dma.hbm_to_vmem [thread:$0]  %s3, 1024, %s37, [#allocation7], 64, 64, 4
    $region17: #{tpu_custom_call.1} parent=1 // pred_fallthru
      _
    // Predicated region
    $region18: #{tpu_custom_call.1} parent=1 // pred_check
      _
    $region19: #{tpu_custom_call.1} parent=1 // pred_check_branch
      %44 = sbr.rel (0) target = $region21
    $region20: #{tpu_custom_call.1} parent=1 // pred_region
      _
    $region21: #{tpu_custom_call.1} parent=1 // pred_fallthru
      _
    // Predicated region
    $region22: #{tpu_custom_call.1} parent=1 // pred_check
      _
    $region23: #{tpu_custom_call.1} parent=1 // pred_check_branch
      %46 = sbr.rel (0) target = $region25
    $region24: #{tpu_custom_call.1} parent=1 // pred_region
      _
    $region25: #{tpu_custom_call.1} parent=1 // pred_fallthru
      _
    // Predicated region
    $region26: #{tpu_custom_call.1} parent=1 // pred_check
      _
    $region27: #{tpu_custom_call.1} parent=1 // pred_check_branch
      %48 = sbr.rel (0) target = $region29
    $region28: #{tpu_custom_call.1} parent=1 // pred_region
      %49 = dma.done [#allocation4], 256
    $region29: #{tpu_custom_call.1} parent=1 // pred_fallthru
      _
    // Predicated region
    $region30: #{tpu_custom_call.1} parent=1 // pred_check
      _
    $region31: #{tpu_custom_call.1} parent=1 // pred_check_branch
      %51 = sbr.rel (0) target = $region33
    $region32: #{tpu_custom_call.1} parent=1 // pred_region
      %52 = dma.done [#allocation7], 1024
    $region33: #{tpu_custom_call.1} parent=1 // pred_fallthru
      _
    %v54 = vld [vmem:[#allocation3] sm:$0xf]
    %v55 = vld [vmem:[#allocation3 + $0x4] sm:$0xf]
    %v56 = vld [vmem:[#allocation3 + $0x8] sm:$0xf]
    %v57 = vld [vmem:[#allocation3 + $0xc] sm:$0xf]
    %v58 = vld [vmem:[#allocation6] sm:$0xf]
    %v59 = vld [vmem:[#allocation6 + $0x4] sm:$0xf]
    %v60 = vld [vmem:[#allocation6 + $0x8] sm:$0xf]
    %v61 = vld [vmem:[#allocation6 + $0xc] sm:$0xf]
    %v62 = vld [vmem:[#allocation6 + $0x10] sm:$0xf]
    %v63 = vld [vmem:[#allocation6 + $0x14] sm:$0xf]
    %v64 = vld [vmem:[#allocation6 + $0x18] sm:$0xf]
    %v65 = vld [vmem:[#allocation6 + $0x1c] sm:$0xf]
    %v66 = vld [vmem:[#allocation6 + $0x20] sm:$0xf]
    %v67 = vld [vmem:[#allocation6 + $0x24] sm:$0xf]
    %v68 = vld [vmem:[#allocation6 + $0x28] sm:$0xf]
    %v69 = vld [vmem:[#allocation6 + $0x2c] sm:$0xf]
    %v70 = vld [vmem:[#allocation6 + $0x30] sm:$0xf]
    %v71 = vld [vmem:[#allocation6 + $0x34] sm:$0xf]
    %v72 = vld [vmem:[#allocation6 + $0x38] sm:$0xf]
    %v73 = vld [vmem:[#allocation6 + $0x3c] sm:$0xf]
    %v78 = vunpack.c.l.b16 %v54
    %v79 = vunpack.c.l.b16 %v55
    %v80 = vunpack.c.l.b16 %v56
    %v81 = vunpack.c.l.b16 %v57
    %v82 = vpack.c.b16 %v79, %v78
    %v83 = vpack.c.b16 %v81, %v80
    %v102 = vunpack.c.l.b16 %v58
    %v103 = vunpack.c.l.b16 %v59
    %v104 = vunpack.c.l.b16 %v60
    %v105 = vunpack.c.l.b16 %v61
    %v106 = vunpack.c.l.b16 %v62
    %v107 = vunpack.c.l.b16 %v63
    %v108 = vunpack.c.l.b16 %v64
    %v109 = vunpack.c.l.b16 %v65
    %v110 = vunpack.c.l.b16 %v66
    %v111 = vunpack.c.l.b16 %v67
    %v112 = vunpack.c.l.b16 %v68
    %v113 = vunpack.c.l.b16 %v69
    %v114 = vunpack.c.l.b16 %v70
    %v115 = vunpack.c.l.b16 %v71
    %v116 = vunpack.c.l.b16 %v72
    %v117 = vunpack.c.l.b16 %v73
    %v118 = vpack.c.b16 %v103, %v102
    %v119 = vpack.c.b16 %v105, %v104
    %v120 = vpack.c.b16 %v107, %v106
    %v121 = vpack.c.b16 %v109, %v108
    %v122 = vpack.c.b16 %v111, %v110
    %v123 = vpack.c.b16 %v113, %v112
    %v124 = vpack.c.b16 %v115, %v114
    %v125 = vpack.c.b16 %v117, %v116
    %134 = vmatprep.subr.bf16.mxu0 0
    %135 = vmatpush1.bf16.msra.mxu0 %v125
    %136 = vmatprep.subr.bf16.mxu0 0
    %137 = vmatpush1.bf16.msra.mxu0 %v124
    %138 = vmatprep.subr.bf16.mxu0 0
    %139 = vmatpush1.bf16.msra.mxu0 %v123
    %140 = vmatprep.subr.bf16.mxu0 0
    %141 = vmatpush1.bf16.msra.mxu0 %v122
    %142 = vmatprep.subr.bf16.mxu0 0
    %143 = vmatpush1.bf16.msra.mxu0 %v121
    %144 = vmatprep.subr.bf16.mxu0 0
    %145 = vmatpush1.bf16.msra.mxu0 %v120
    %146 = vmatprep.subr.bf16.mxu0 0
    %147 = vmatpush1.bf16.msra.mxu0 %v119
    %148 = vmatprep.subr.bf16.mxu0 0
    %149 = vmatpush1.bf16.msra.mxu0 %v118
    %150 = vmatprep.subr.bf16.mxu0 0
    %151 = vmatpush2.bf16.msra.mxu0 0
    %152 = vmatprep.subr.bf16.mxu0 0
    %153 = vmatpush2.bf16.msra.mxu0 0
    %154 = vmatprep.subr.bf16.mxu0 0
    %155 = vmatpush2.bf16.msra.mxu0 0
    %156 = vmatprep.subr.bf16.mxu0 0
    %157 = vmatpush2.bf16.msra.mxu0 0
    %158 = vmatprep.subr.bf16.mxu0 0
    %159 = vmatpush2.bf16.msra.mxu0 0
    %160 = vmatprep.subr.bf16.mxu0 0
    %161 = vmatpush2.bf16.msra.mxu0 0
    %162 = vmatprep.subr.bf16.mxu0 0
    %163 = vmatpush2.bf16.msra.mxu0 0
    %164 = vmatprep.subr.bf16.mxu0 0
    %165 = vmatpush2.bf16.msra.mxu0 0
    %166 = vmatprep.mubr.bf16.mxu0 0
    %167 = vmatmul.mubr.bf16.gmra.mxu0 %v82
    %v168 = vpop.f32.mrf.mxu0
    %v169 = vadd.f32 0.0, %v168
    %v170 = vpop.f32.mrf.mxu0
    %v171 = vpop.f32.mrf.mxu0
    %v172 = vadd.f32 0.0, %v171
    %v173 = vpop.f32.mrf.mxu0
    %174 = vmatprep.mubr.bf16.mxu0 0
    %175 = vmatmul.mubr.bf16.gmra.mxu0 %v83
    %v176 = vpop.f32.mrf.mxu0
    %v177 = vadd.f32 0.0, %v176
    %v178 = vpop.f32.mrf.mxu0
    %v179 = vpop.f32.mrf.mxu0
    %v180 = vadd.f32 0.0, %v179
    %v181 = vpop.f32.mrf.mxu0
    %182 = vdwg.mxu0
    %v183 = vld [vmem:[%s1] sm:$0x1]
    %v184 = vld [vmem:[%s1 + $0x1] sm:$0x1]
    %v187 = vlaneseq
    %v188 = vshrl.u32 %v187, 7
    %v189 = vsub.s32 0, %v188
    %v190 = vrot.slane %v183, %v189
    %v191 = vlaneseq
    %v192 = vshrl.u32 %v191, 7
    %v193 = vsub.s32 0, %v192
    %v194 = vrot.slane %v184, %v193
    %v197 = vadd.f32 %v169, %v190
    %v198 = vadd.f32 %v172, %v190
    %v199 = vadd.f32 %v177, %v194
    %v200 = vadd.f32 %v180, %v194
    %v201 = vpack.c.bf16 %v198, %v197
    %v202 = vpack.c.bf16 %v200, %v199
    %v203 = vtanh.bf16.pop %v201
    %v204 = vtanh.bf16.pop %v202
    %v205 = vld [vmem:[%s4] sm:$0x1]
    %s206 = sld [smem:[#allocation2]]
    %v207 = vstv %s206
    %208 = vmatprep.subr.bf16.mxu0 0
    %209 = vmatpush1.bf16.xpose.msra.mxu0 0
    %210 = vmatprep.subr.bf16.mxu0 0
    %211 = vmatpush1.bf16.xpose.msra.mxu0 0
    %212 = vmatprep.subr.bf16.mxu0 0
    %213 = vmatpush1.bf16.xpose.msra.mxu0 0
    %214 = vmatprep.subr.bf16.mxu0 0
    %215 = vmatpush1.bf16.xpose.msra.mxu0 0
    %216 = vmatprep.subr.bf16.mxu0 0
    %217 = vmatpush1.bf16.xpose.msra.mxu0 0
    %218 = vmatprep.subr.bf16.mxu0 0
    %219 = vmatpush1.bf16.xpose.msra.mxu0 0
    %220 = vmatprep.subr.bf16.mxu0 0
    %221 = vmatpush1.bf16.xpose.msra.mxu0 %v204
    %222 = vmatprep.subr.bf16.mxu0 0
    %223 = vmatpush1.bf16.xpose.msra.mxu0 %v203
    %224 = vmatprep.subr.bf16.mxu0 0
    %225 = vmatpush2.bf16.xpose.msra.mxu0 0
    %226 = vmatprep.subr.bf16.mxu0 0
    %227 = vmatpush2.bf16.xpose.msra.mxu0 0
    %228 = vmatprep.subr.bf16.mxu0 0
    %229 = vmatpush2.bf16.xpose.msra.mxu0 0
    %230 = vmatprep.subr.bf16.mxu0 0
    %231 = vmatpush2.bf16.xpose.msra.mxu0 0
    %232 = vmatprep.subr.bf16.mxu0 0
    %233 = vmatpush2.bf16.xpose.msra.mxu0 0
    %234 = vmatprep.subr.bf16.mxu0 0
    %235 = vmatpush2.bf16.xpose.msra.mxu0 0
    %236 = vmatprep.subr.bf16.mxu0 0
    %237 = vmatpush2.bf16.xpose.msra.mxu0 0
    %238 = vmatprep.subr.bf16.mxu0 0
    %239 = vmatpush2.bf16.xpose.msra.mxu0 0
    %240 = vmatprep.mubr.bf16.mxu0 0
    %241 = vmatmul.mubr.bf16.gmra.mxu0 %v205
    %v242 = vpop.f32.mrf.mxu0
    %v243 = vadd.f32 %v207, %v242
    %v244 = vpop.f32.mrf.mxu0
    %v245 = vpop.f32.mrf.mxu0
    %v246 = vpop.f32.mrf.mxu0
    %247 = vdwg.mxu0
    %v248 = vld [vmem:[%s2] sm:$0x1]
    %v249 = vadd.f32 %v243, %v248
    %vm250 = vcmask 253952
    %251 = vst.msk [vmem:[#allocation8] sm:$0x1] %vm250, %v249
    // Predicated region
    $region34: #{tpu_custom_call.1} parent=1 // pred_check
      _
    $region35: #{tpu_custom_call.1} parent=1 // pred_check_branch
      %253 = sbr.rel (0) target = $region37
    $region36: #{tpu_custom_call.1} parent=1 // pred_region
      %s255 = ssub.s32 16, 16
      %256 = vsyncadd [#allocation5], %s255
      %s258 = sshll.u32 [#allocation8], 4
      %s259 = int_to_ptr.vmem [resolvable:$true] %s258
      %261 = dma.vmem_to_hbm [thread:$0]  %s259, 16, %s6, [#allocation5]
    $region37: #{tpu_custom_call.1} parent=1 // pred_fallthru
      _
    // Predicated region
    $region38: #{tpu_custom_call.1} parent=1 // pred_check
      _
    $region39: #{tpu_custom_call.1} parent=1 // pred_check_branch
      %263 = sbr.rel (0) target = $region41
    $region40: #{tpu_custom_call.1} parent=1 // pred_region
      %264 = dma.done [#allocation5], 16
    $region41: #{tpu_custom_call.1} parent=1 // pred_fallthru
      _
    %265 = vsyncpa [#allocation4], 1
    %266 = vsyncpa [#allocation7], 1
    %267 = vsyncpa [#allocation5], 1

</llo_original>
